<compile_context>
chip_gen: v7x
topology: tpu7x:2x2x1
jax: 0.10.0
libtpu: 0.0.40
codegen_flags: <defaults>
</compile_context>

<pallas_src>
import jax
import jax.numpy as jnp
from jax.experimental import pallas as pl
from jax.experimental.pallas import tpu as pltpu


def _round_up(x, m):
    return (x + m - 1) // m * m


def size_regularizer_kernel(xT_ref, u_ref, v_ref,
                            w_in_ref, b_in_ref,
                            w_hid_ref, b_hid_ref,
                            w_out_ref, b_out_ref,
                            out_ref):
    # xT_ref: [F, TILE_E] bf16 ; weights W: [out, in] (PyTorch layout) so h = W @ x.
    x = xT_ref[...]                                                   # bf16 [F, TE]

    # linear_in + relu  (MXU bf16 matmul, f32 accumulate; bias broadcast along lanes)
    h = jnp.dot(w_in_ref[...], x, preferred_element_type=jnp.float32)  # [H, TE] f32
    h = jnp.maximum(h + b_in_ref[...], 0.0)

    # linear_hidden + relu
    h = jnp.dot(w_hid_ref[...], h.astype(jnp.bfloat16),
                preferred_element_type=jnp.float32)                    # [H, TE] f32
    h = jnp.maximum(h + b_hid_ref[...], 0.0)

    # dropout(p=0.5): identity in eval mode.

    # linear_out + sigmoid -> gamma, shape [1, TE].
    # N=1 projection done as VPU multiply + sublane reduce (keeps the MXU slot free).
    g = jnp.sum(h * w_out_ref[...], axis=0, keepdims=True) + b_out_ref[...]
    gamma = jax.nn.sigmoid(g)                                          # [1, TE]

    # (1/u)**gamma + (1/v)**gamma  ==  exp(-gamma*log(u)) + exp(-gamma*log(v))
    neg_log_u = -jnp.log(u_ref[...])
    neg_log_v = -jnp.log(v_ref[...])
    tmp = jnp.exp(gamma * neg_log_u) + jnp.exp(gamma * neg_log_v)
    out_ref[...] = (1.0 / tmp).astype(out_ref.dtype)


def size_regularizer(u_size, v_size, edge_features, params, tile_e=1024):
    """u_size, v_size: [E, 1] f32; edge_features: [E, F] f32.  Returns [E, 1] f32."""
    E, F = edge_features.shape
    w_in, b_in, w_hid, b_hid, w_out, b_out = params   # PyTorch layout: W [out,in], b [out]
    H = w_in.shape[0]

    # --- host/JAX-side layout plumbing (done once, outside the kernel) -------------
    e_aligned = _round_up(E, 128)
    tile_e = min(tile_e, e_aligned)
    E_pad = _round_up(E, tile_e)
    n_tiles = E_pad // tile_e

    xT = jnp.zeros((F, E_pad), jnp.bfloat16).at[:, :E].set(
        edge_features.T.astype(jnp.bfloat16))
    # Pad sizes with 1.0 so log() of padded columns stays finite (results are discarded).
    u = jnp.ones((1, E_pad), jnp.float32).at[0, :E].set(u_size.reshape(-1))
    v = jnp.ones((1, E_pad), jnp.float32).at[0, :E].set(v_size.reshape(-1))

    w_in_b = w_in.astype(jnp.bfloat16)                       # [H, F]
    w_hid_b = w_hid.astype(jnp.bfloat16)                     # [H, H]
    b_in_c = b_in.reshape(H, 1).astype(jnp.float32)          # [H, 1]
    b_hid_c = b_hid.reshape(H, 1).astype(jnp.float32)        # [H, 1]
    w_out_c = w_out.reshape(H, 1).astype(jnp.float32)        # [H, 1]
    b_out_c = b_out.reshape(1, 1).astype(jnp.float32)        # [1, 1]

    # --- specs ----------------------------------------------------------------------
    edge_spec = pl.BlockSpec((F, tile_e), lambda i: (0, i))
    size_spec = pl.BlockSpec((1, tile_e), lambda i: (0, i))
    out_spec = pl.BlockSpec((1, tile_e), lambda i: (0, i))

    def resident(shape):
        # full-array block, same index every step -> stays in VMEM, no per-step DMA
        return pl.BlockSpec(shape, lambda i: (0, 0))

    cost = pl.CostEstimate(
        flops=2 * E_pad * (F * H + H * H + H),
        transcendentals=6 * E_pad,
        bytes_accessed=int(xT.size * 2 + (u.size + v.size + E_pad) * 4
                           + (w_in_b.size + w_hid_b.size) * 2
                           + (b_in_c.size + b_hid_c.size + w_out_c.size + b_out_c.size) * 4),
    )

    out_padded = pl.pallas_call(
        size_regularizer_kernel,
        out_shape=jax.ShapeDtypeStruct((1, E_pad), jnp.float32),
        grid=(n_tiles,),
        in_specs=[
            edge_spec,                  # xT
            size_spec,                  # u
            size_spec,                  # v
            resident((H, F)),           # w_in
            resident((H, 1)),           # b_in
            resident((H, H)),           # w_hid
            resident((H, 1)),           # b_hid
            resident((H, 1)),           # w_out (column vector for VPU projection)
            resident((1, 1)),           # b_out
        ],
        out_specs=out_spec,
        compiler_params=pltpu.CompilerParams(
            dimension_semantics=("parallel",)),   # megacore sharding on v7x
        cost_estimate=cost,
    )(xT, u, v, w_in_b, b_in_c, w_hid_b, b_hid_c, w_out_c, b_out_c)

    return out_padded[0, :E].reshape(E, 1)


def init_params(key, n_edge_feat, n_hidden):
    """Deterministic synthetic parameters in PyTorch nn.Linear layout (W: [out, in])."""
    ks = jax.random.split(key, 6)
    w_in = jax.random.normal(ks[0], (n_hidden, n_edge_feat), jnp.float32) * 0.2
    b_in = jax.random.normal(ks[1], (n_hidden,), jnp.float32) * 0.05
    w_hid = jax.random.normal(ks[2], (n_hidden, n_hidden), jnp.float32) * 0.2
    b_hid = jax.random.normal(ks[3], (n_hidden,), jnp.float32) * 0.05
    w_out = jax.random.normal(ks[4], (1, n_hidden), jnp.float32) * 0.2
    b_out = jax.random.normal(ks[5], (1,), jnp.float32) * 0.05
    return (w_in, b_in, w_hid, b_hid, w_out, b_out)


def reference(u_size, v_size, edge_features, params):
    """Pure-JAX reference mirroring the kernel's bf16 matmul inputs / f32 accumulation."""
    w_in, b_in, w_hid, b_hid, w_out, b_out = params
    x = edge_features.astype(jnp.bfloat16)
    h = jnp.dot(x, w_in.T.astype(jnp.bfloat16),
                preferred_element_type=jnp.float32) + b_in
    h = jnp.maximum(h, 0.0)
    h = jnp.dot(h.astype(jnp.bfloat16), w_hid.T.astype(jnp.bfloat16),
                preferred_element_type=jnp.float32) + b_hid
    h = jnp.maximum(h, 0.0)
    gamma = jax.nn.sigmoid(h @ w_out.T + b_out)
    tmp = (1.0 / u_size) ** gamma + (1.0 / v_size) ** gamma
    return 1.0 / tmp


if __name__ == "__main__":
    n_edge_feat = 16
    n_hidden = 2 * n_edge_feat   # Mlp default n_hidden_factor=2
    E = 128                      # number of edges (small demo shape)

    key = jax.random.PRNGKey(0)
    k_ef, k_u, k_v, k_p = jax.random.split(key, 4)

    edge_features = jax.random.normal(k_ef, (E, n_edge_feat), jnp.float32)
    # sizes are positive counts
    u_size = jax.random.randint(k_u, (E, 1), 1, 20).astype(jnp.float32)
    v_size = jax.random.randint(k_v, (E, 1), 1, 20).astype(jnp.float32)

    params = init_params(k_p, n_edge_feat, n_hidden)

    out = size_regularizer(u_size, v_size, edge_features, params)
    out = jax.block_until_ready(out)

    ref = reference(u_size, v_size, edge_features, params)
    assert out.shape == (E, 1)
    assert jnp.allclose(out, ref, atol=1e-4, rtol=1e-4), "mismatch vs. pure-JAX reference"

    print("KERNEL_OK")
</pallas_src>

<mosaic_0001>
module attributes {stable_mosaic.version = 11 : i64} {
  func.func @size_regularizer_kernel(%arg0: i32, %arg1: memref<16x128xbf16, #tpu.memory_space<vmem>>, %arg2: memref<1x128xf32, #tpu.memory_space<vmem>>, %arg3: memref<1x128xf32, #tpu.memory_space<vmem>>, %arg4: memref<32x16xbf16, #tpu.memory_space<vmem>>, %arg5: memref<32x1xf32, #tpu.memory_space<vmem>>, %arg6: memref<32x32xbf16, #tpu.memory_space<vmem>>, %arg7: memref<32x1xf32, #tpu.memory_space<vmem>>, %arg8: memref<32x1xf32, #tpu.memory_space<vmem>>, %arg9: memref<1x1xf32, #tpu.memory_space<vmem>>, %arg10: memref<1x128xf32, #tpu.memory_space<vmem>>) attributes {dimension_semantics = [#tpu.dimension_semantics<parallel>], iteration_bounds = array<i64: 1>, scalar_prefetch = 0 : i64, scratch_operands = 0 : i64, tpu.core_type = #tpu.core_type<tc>, window_params = [{transform_indices = @transform_0, window_bounds = array<i64: 16, 128>}, {transform_indices = @transform_1, window_bounds = array<i64: 1, 128>}, {transform_indices = @transform_2, window_bounds = array<i64: 1, 128>}, {pipeline_mode = #tpu.pipeline_mode<synchronous>, transform_indices = @transform_3, window_bounds = array<i64: 32, 16>}, {pipeline_mode = #tpu.pipeline_mode<synchronous>, transform_indices = @transform_4, window_bounds = array<i64: 32, 1>}, {pipeline_mode = #tpu.pipeline_mode<synchronous>, transform_indices = @transform_5, window_bounds = array<i64: 32, 32>}, {pipeline_mode = #tpu.pipeline_mode<synchronous>, transform_indices = @transform_6, window_bounds = array<i64: 32, 1>}, {pipeline_mode = #tpu.pipeline_mode<synchronous>, transform_indices = @transform_7, window_bounds = array<i64: 32, 1>}, {pipeline_mode = #tpu.pipeline_mode<synchronous>, transform_indices = @transform_8, window_bounds = array<i64: 1, 1>}, {transform_indices = @transform_9, window_bounds = array<i64: 1, 128>}]} {
    %c0 = arith.constant 0 : index
    %c0_0 = arith.constant 0 : index
    %0 = vector.load %arg1[%c0, %c0_0] : memref<16x128xbf16, #tpu.memory_space<vmem>>, vector<16x128xbf16>
    %c0_1 = arith.constant 0 : index
    %c0_2 = arith.constant 0 : index
    %1 = vector.load %arg4[%c0_1, %c0_2] : memref<32x16xbf16, #tpu.memory_space<vmem>>, vector<32x16xbf16>
    %cst = arith.constant dense<0.000000e+00> : vector<32x128xf32>
    %2 = tpu.matmul %1, %0, %cst {dimension_numbers = #tpu.dot_dimension_numbers<[1], [0], [0], [1], [0, 0, 1, 1], [], []>} : vector<32x16xbf16>, vector<16x128xbf16>, vector<32x128xf32> -> vector<32x128xf32>
    %c0_3 = arith.constant 0 : index
    %c0_4 = arith.constant 0 : index
    %3 = vector.load %arg5[%c0_3, %c0_4] : memref<32x1xf32, #tpu.memory_space<vmem>>, vector<32x1xf32>
    %4 = vector.broadcast %3 : vector<32x1xf32> to vector<32x128xf32>
    %5 = arith.addf %2, %4 : vector<32x128xf32>
    %cst_5 = arith.constant 0.000000e+00 : f32
    %6 = vector.broadcast %cst_5 : f32 to vector<32x128xf32>
    %7 = arith.maximumf %5, %6 : vector<32x128xf32>
    %c0_6 = arith.constant 0 : index
    %c0_7 = arith.constant 0 : index
    %8 = vector.load %arg6[%c0_6, %c0_7] : memref<32x32xbf16, #tpu.memory_space<vmem>>, vector<32x32xbf16>
    %9 = arith.truncf %7 : vector<32x128xf32> to vector<32x128xbf16>
    %cst_8 = arith.constant dense<0.000000e+00> : vector<32x128xf32>
    %10 = tpu.matmul %8, %9, %cst_8 {dimension_numbers = #tpu.dot_dimension_numbers<[1], [0], [0], [1], [0, 0, 1, 1], [], []>} : vector<32x32xbf16>, vector<32x128xbf16>, vector<32x128xf32> -> vector<32x128xf32>
    %c0_9 = arith.constant 0 : index
    %c0_10 = arith.constant 0 : index
    %11 = vector.load %arg7[%c0_9, %c0_10] : memref<32x1xf32, #tpu.memory_space<vmem>>, vector<32x1xf32>
    %12 = vector.broadcast %11 : vector<32x1xf32> to vector<32x128xf32>
    %13 = arith.addf %10, %12 : vector<32x128xf32>
    %cst_11 = arith.constant 0.000000e+00 : f32
    %14 = vector.broadcast %cst_11 : f32 to vector<32x128xf32>
    %15 = arith.maximumf %13, %14 : vector<32x128xf32>
    %c0_12 = arith.constant 0 : index
    %c0_13 = arith.constant 0 : index
    %16 = vector.load %arg8[%c0_12, %c0_13] : memref<32x1xf32, #tpu.memory_space<vmem>>, vector<32x1xf32>
    %17 = vector.broadcast %16 : vector<32x1xf32> to vector<32x128xf32>
    %18 = arith.mulf %15, %17 : vector<32x128xf32>
    %cst_14 = arith.constant dense<0.000000e+00> : vector<128xf32>
    %19 = vector.multi_reduction <add>, %18, %cst_14 [0] : vector<32x128xf32> to vector<128xf32>
    %20 = vector.shape_cast %19 : vector<128xf32> to vector<1x128xf32>
    %c0_15 = arith.constant 0 : index
    %c0_16 = arith.constant 0 : index
    %21 = vector.load %arg9[%c0_15, %c0_16] : memref<1x1xf32, #tpu.memory_space<vmem>>, vector<1x1xf32>
    %22 = vector.broadcast %21 : vector<1x1xf32> to vector<1x128xf32>
    %23 = arith.addf %20, %22 : vector<1x128xf32>
    %24 = arith.negf %23 : vector<1x128xf32>
    %25 = math.exp %24 : vector<1x128xf32>
    %cst_17 = arith.constant 1.000000e+00 : f32
    %26 = vector.broadcast %cst_17 : f32 to vector<1x128xf32>
    %27 = arith.addf %26, %25 : vector<1x128xf32>
    %28 = arith.divf %26, %27 : vector<1x128xf32>
    %c0_18 = arith.constant 0 : index
    %c0_19 = arith.constant 0 : index
    %29 = vector.load %arg2[%c0_18, %c0_19] : memref<1x128xf32, #tpu.memory_space<vmem>>, vector<1x128xf32>
    %30 = math.log %29 : vector<1x128xf32>
    %cst_20 = arith.constant 0.000000e+00 : f32
    %31 = vector.broadcast %cst_20 : f32 to vector<1x128xf32>
    %32 = arith.subf %31, %30 : vector<1x128xf32>
    %c0_21 = arith.constant 0 : index
    %c0_22 = arith.constant 0 : index
    %33 = vector.load %arg3[%c0_21, %c0_22] : memref<1x128xf32, #tpu.memory_space<vmem>>, vector<1x128xf32>
    %34 = math.log %33 : vector<1x128xf32>
    %cst_23 = arith.constant 0.000000e+00 : f32
    %35 = vector.broadcast %cst_23 : f32 to vector<1x128xf32>
    %36 = arith.subf %35, %34 : vector<1x128xf32>
    %37 = arith.mulf %28, %32 : vector<1x128xf32>
    %38 = math.exp %37 : vector<1x128xf32>
    %39 = arith.mulf %28, %36 : vector<1x128xf32>
    %40 = math.exp %39 : vector<1x128xf32>
    %41 = arith.addf %38, %40 : vector<1x128xf32>
    %cst_24 = arith.constant 1.000000e+00 : f32
    %42 = vector.broadcast %cst_24 : f32 to vector<1x128xf32>
    %43 = arith.divf %42, %41 : vector<1x128xf32>
    %c0_25 = arith.constant 0 : index
    %c0_26 = arith.constant 0 : index
    %44 = vector.load %arg10[%c0_25, %c0_26] : memref<1x128xf32, #tpu.memory_space<vmem>>, vector<1x128xf32>
    tpu.vector_store %arg10[%c0_25, %c0_26], %43 {strides = array<i32>} : memref<1x128xf32, #tpu.memory_space<vmem>>, vector<1x128xf32>,
    return
  }
  func.func @transform_0(%arg0: i32) -> (i32, i32) {
    %c0_i32 = arith.constant 0 : i32
    %c0_i32_0 = arith.constant 0 : i32
    return %c0_i32, %arg0 : i32, i32
  }
  func.func @transform_1(%arg0: i32) -> (i32, i32) {
    %c0_i32 = arith.constant 0 : i32
    %c0_i32_0 = arith.constant 0 : i32
    return %c0_i32, %arg0 : i32, i32
  }
  func.func @transform_2(%arg0: i32) -> (i32, i32) {
    %c0_i32 = arith.constant 0 : i32
    %c0_i32_0 = arith.constant 0 : i32
    return %c0_i32, %arg0 : i32, i32
  }
  func.func @transform_3(%arg0: i32) -> (i32, i32) {
    %c0_i32 = arith.constant 0 : i32
    %c0_i32_0 = arith.constant 0 : i32
    %c0_i32_1 = arith.constant 0 : i32
    return %c0_i32, %c0_i32_0 : i32, i32
  }
  func.func @transform_4(%arg0: i32) -> (i32, i32) {
    %c0_i32 = arith.constant 0 : i32
    %c0_i32_0 = arith.constant 0 : i32
    %c0_i32_1 = arith.constant 0 : i32
    return %c0_i32, %c0_i32_0 : i32, i32
  }
  func.func @transform_5(%arg0: i32) -> (i32, i32) {
    %c0_i32 = arith.constant 0 : i32
    %c0_i32_0 = arith.constant 0 : i32
    %c0_i32_1 = arith.constant 0 : i32
    return %c0_i32, %c0_i32_0 : i32, i32
  }
  func.func @transform_6(%arg0: i32) -> (i32, i32) {
    %c0_i32 = arith.constant 0 : i32
    %c0_i32_0 = arith.constant 0 : i32
    %c0_i32_1 = arith.constant 0 : i32
    return %c0_i32, %c0_i32_0 : i32, i32
  }
  func.func @transform_7(%arg0: i32) -> (i32, i32) {
    %c0_i32 = arith.constant 0 : i32
    %c0_i32_0 = arith.constant 0 : i32
    %c0_i32_1 = arith.constant 0 : i32
    return %c0_i32, %c0_i32_0 : i32, i32
  }
  func.func @transform_8(%arg0: i32) -> (i32, i32) {
    %c0_i32 = arith.constant 0 : i32
    %c0_i32_0 = arith.constant 0 : i32
    %c0_i32_1 = arith.constant 0 : i32
    return %c0_i32, %c0_i32_0 : i32, i32
  }
  func.func @transform_9(%arg0: i32) -> (i32, i32) {
    %c0_i32 = arith.constant 0 : i32
    %c0_i32_0 = arith.constant 0 : i32
    return %c0_i32, %arg0 : i32, i32
  }
}

</mosaic_0001>

<llo_original>
// kernel: tpu_custom_call.1
$region0: #{tpu_custom_call.1}
  #allocation0 [shape = 'u32[]', space=smem, size = 0x4, offset = 0x4, fixed_abs, tag = 'smem constant byte address 0x4 - core index']
  #allocation1 [shape = 'u32[144,128]{1,0:T(1,128)}', space=vmem, size = 0x12000, scoped, tag = 'internal scratch']
  #allocation2 [shape = 'f32[1,1]{1,0:T(1,128)S(1)}', space=vmem, size = 0x200, scoped, tag = 'scoped memory for tpu_custom_call.1']
  %s0 = inlined_call_operand.vmem [shape: bf16[16,128], index: 0, kind: input, shape index: {}]
  %s1 = inlined_call_operand.vmem [shape: f32[1,128], index: 1, kind: input, shape index: {}]
  %s2 = inlined_call_operand.vmem [shape: f32[1,128], index: 2, kind: input, shape index: {}]
  %s3 = inlined_call_operand.vmem [shape: bf16[32,16], index: 3, kind: input, shape index: {}]
  %s4 = inlined_call_operand.vmem [shape: f32[32,1], index: 4, kind: input, shape index: {}]
  %s5 = inlined_call_operand.vmem [shape: bf16[32,32], index: 5, kind: input, shape index: {}]
  %s6 = inlined_call_operand.vmem [shape: f32[32,1], index: 6, kind: input, shape index: {}]
  %s7 = inlined_call_operand.vmem [shape: f32[32,1], index: 7, kind: input, shape index: {}]
  %s8 = inlined_call_operand.<no memory space> [shape: f32[1,1], index: 8, kind: input, shape index: {}]
  %s9 = inlined_call_operand.hbm [shape: f32[1,128], index: 9, kind: output, shape index: {}]
  %s10 = sld [smem:[#allocation0]]
  $region46: #{tpu_custom_call.1} parent=0
    _
  %s12 = ssub.s32 1, %s10
  %s13 = scalar_select 0, %s12, %s10
  %v14 = vstv %s8
  %15 = vst [vmem:[#allocation2] sm:$0x1] %v14
  $region1: #{tpu_custom_call.1} parent=0
    #allocation3 [shape = 'u8[512]{0}', space=vmem, size = 0x400, scoped, tag = 'output window, operand 0, single buffered']
    #allocation4 [shape = 's32[1]{0}', space=sflag, size = 0x4, scoped, tag = 'scoped memory for tpu_custom_call.1']
    %16 = vsyncpa [#allocation4], 0
    // Predicated region
    $region2: #{tpu_custom_call.1} parent=1 // pred_check
      _
    $region3: #{tpu_custom_call.1} parent=1 // pred_check_branch
      %18 = sbr.rel (0) target = $region5
    $region4: #{tpu_custom_call.1} parent=1 // pred_region
      _
    $region5: #{tpu_custom_call.1} parent=1 // pred_fallthru
      _
    // Predicated region
    $region6: #{tpu_custom_call.1} parent=1 // pred_check
      _
    $region7: #{tpu_custom_call.1} parent=1 // pred_check_branch
      %20 = sbr.rel (0) target = $region9
    $region8: #{tpu_custom_call.1} parent=1 // pred_region
      _
    $region9: #{tpu_custom_call.1} parent=1 // pred_fallthru
      _
    // Predicated region
    $region10: #{tpu_custom_call.1} parent=1 // pred_check
      _
    $region11: #{tpu_custom_call.1} parent=1 // pred_check_branch
      %22 = sbr.rel (0) target = $region13
    $region12: #{tpu_custom_call.1} parent=1 // pred_region
      _
    $region13: #{tpu_custom_call.1} parent=1 // pred_fallthru
      _
    // Predicated region
    $region14: #{tpu_custom_call.1} parent=1 // pred_check
      _
    $region15: #{tpu_custom_call.1} parent=1 // pred_check_branch
      %24 = sbr.rel (0) target = $region17
    $region16: #{tpu_custom_call.1} parent=1 // pred_region
      _
    $region17: #{tpu_custom_call.1} parent=1 // pred_fallthru
      _
    // Predicated region
    $region18: #{tpu_custom_call.1} parent=1 // pred_check
      _
    $region19: #{tpu_custom_call.1} parent=1 // pred_check_branch
      %26 = sbr.rel (0) target = $region21
    $region20: #{tpu_custom_call.1} parent=1 // pred_region
      _
    $region21: #{tpu_custom_call.1} parent=1 // pred_fallthru
      _
    // Predicated region
    $region22: #{tpu_custom_call.1} parent=1 // pred_check
      _
    $region23: #{tpu_custom_call.1} parent=1 // pred_check_branch
      %28 = sbr.rel (0) target = $region25
    $region24: #{tpu_custom_call.1} parent=1 // pred_region
      _
    $region25: #{tpu_custom_call.1} parent=1 // pred_fallthru
      _
    // Predicated region
    $region26: #{tpu_custom_call.1} parent=1 // pred_check
      _
    $region27: #{tpu_custom_call.1} parent=1 // pred_check_branch
      %30 = sbr.rel (0) target = $region29
    $region28: #{tpu_custom_call.1} parent=1 // pred_region
      _
    $region29: #{tpu_custom_call.1} parent=1 // pred_fallthru
      _
    // Predicated region
    $region30: #{tpu_custom_call.1} parent=1 // pred_check
      _
    $region31: #{tpu_custom_call.1} parent=1 // pred_check_branch
      %32 = sbr.rel (0) target = $region33
    $region32: #{tpu_custom_call.1} parent=1 // pred_region
      _
    $region33: #{tpu_custom_call.1} parent=1 // pred_fallthru
      _
    // Predicated region
    $region34: #{tpu_custom_call.1} parent=1 // pred_check
      _
    $region35: #{tpu_custom_call.1} parent=1 // pred_check_branch
      %34 = sbr.rel (0) target = $region37
    $region36: #{tpu_custom_call.1} parent=1 // pred_region
      _
    $region37: #{tpu_custom_call.1} parent=1 // pred_fallthru
      _
    %v36 = vld [vmem:[%s0] sm:$0xf]
    %v37 = vld [vmem:[%s0 + $0x4] sm:$0xf]
    %v38 = vld [vmem:[%s3] sm:$0xf]
    %v39 = vld [vmem:[%s3 + $0x4] sm:$0xf]
    %v40 = vld [vmem:[%s3 + $0x8] sm:$0xf]
    %v41 = vld [vmem:[%s3 + $0xc] sm:$0xf]
    %v42 = vld [vmem:[%s4] sm:$0xff]
    %v43 = vld [vmem:[%s4 + $0x8] sm:$0xff]
    %v44 = vld [vmem:[%s4 + $0x10] sm:$0xff]
    %v45 = vld [vmem:[%s4 + $0x18] sm:$0xff]
    %47 = vset.pattern.permute.xlu0 0
    %48 = vperm.xlu0 %47, %v42
    %v49 = vpop.permute.xlu0 %48
    %52 = vset.pattern.permute.xlu0 0
    %53 = vperm.xlu0 %52, %v43
    %v54 = vpop.permute.xlu0 %53
    %57 = vset.pattern.permute.xlu0 0
    %58 = vperm.xlu0 %57, %v44
    %v59 = vpop.permute.xlu0 %58
    %62 = vset.pattern.permute.xlu0 0
    %63 = vperm.xlu0 %62, %v45
    %v64 = vpop.permute.xlu0 %63
    %v70 = vunpack.c.l.b16 %v38
    %v71 = vunpack.c.l.b16 %v39
    %v72 = vunpack.c.l.b16 %v40
    %v73 = vunpack.c.l.b16 %v41
    %v74 = vpack.c.b16 %v71, %v70
    %v75 = vpack.c.b16 %v73, %v72
    %v78 = vunpack.c.l.b16 %v36
    %v79 = vunpack.c.l.b16 %v37
    %v80 = vpack.c.b16 %v79, %v78
    %vm82 = vcmask 130048
    %v84 = vsel %vm82, %v74, 0
    %v87 = vsel %vm82, %v75, 0
    %89 = vmatprep.subr.bf16.mxu0 0
    %90 = vmatpush1.bf16.msra.mxu0 %v80
    %91 = vmatprep.subr.bf16.mxu0 0
    %92 = vmatpush1.bf16.msra.mxu0 0
    %93 = vmatprep.subr.bf16.mxu0 0
    %94 = vmatpush1.bf16.msra.mxu0 0
    %95 = vmatprep.subr.bf16.mxu0 0
    %96 = vmatpush1.bf16.msra.mxu0 0
    %97 = vmatprep.subr.bf16.mxu0 0
    %98 = vmatpush1.bf16.msra.mxu0 0
    %99 = vmatprep.subr.bf16.mxu0 0
    %100 = vmatpush1.bf16.msra.mxu0 0
    %101 = vmatprep.subr.bf16.mxu0 0
    %102 = vmatpush1.bf16.msra.mxu0 0
    %103 = vmatprep.subr.bf16.mxu0 0
    %104 = vmatpush1.bf16.msra.mxu0 0
    %105 = vmatprep.subr.bf16.mxu0 0
    %106 = vmatpush1.bf16.msra.mxu0 0
    %107 = vmatprep.subr.bf16.mxu0 0
    %108 = vmatpush1.bf16.msra.mxu0 0
    %109 = vmatprep.subr.bf16.mxu0 0
    %110 = vmatpush1.bf16.msra.mxu0 0
    %111 = vmatprep.subr.bf16.mxu0 0
    %112 = vmatpush1.bf16.msra.mxu0 0
    %113 = vmatprep.subr.bf16.mxu0 0
    %114 = vmatpush1.bf16.msra.mxu0 0
    %115 = vmatprep.subr.bf16.mxu0 0
    %116 = vmatpush1.bf16.msra.mxu0 0
    %117 = vmatprep.subr.bf16.mxu0 0
    %118 = vmatpush1.bf16.msra.mxu0 0
    %119 = vmatprep.subr.bf16.mxu0 0
    %120 = vmatpush1.bf16.msra.mxu0 0
    %121 = vmatprep.mubr.bf16.mxu0 0
    %122 = vmatmul.mubr.bf16.gmra.mrb[0].mxu0 %v84
    %v123 = vpop.f32.mrb[0].mxu0
    %v124 = vadd.f32 %v49, %v123
    %v125 = vpop.f32.mrb[0].mxu0
    %v126 = vpop.f32.mrb[0].mxu0
    %v127 = vadd.f32 %v54, %v126
    %v128 = vpop.f32.mrb[0].mxu0
    %129 = vmatprep.mubr.bf16.mxu0 0
    %130 = vmatmul.mubr.bf16.gmra.mrb[0].mxu0 %v87
    %v131 = vpop.f32.mrb[0].mxu0
    %v132 = vadd.f32 %v59, %v131
    %v133 = vpop.f32.mrb[0].mxu0
    %v134 = vpop.f32.mrb[0].mxu0
    %v135 = vadd.f32 %v64, %v134
    %v136 = vpop.f32.mrb[0].mxu0
    %137 = vdwg.mxu0
    %v138 = vmax.f32 %v124, 0.0
    %v139 = vmax.f32 %v127, 0.0
    %v140 = vmax.f32 %v132, 0.0
    %v141 = vmax.f32 %v135, 0.0
    %v142 = vld [vmem:[%s5] sm:$0xf]
    %v143 = vld [vmem:[%s5 + $0x4] sm:$0xf]
    %v144 = vld [vmem:[%s5 + $0x8] sm:$0xf]
    %v145 = vld [vmem:[%s5 + $0xc] sm:$0xf]
    %v146 = vpack.c.bf16 %v139, %v138
    %v147 = vpack.c.bf16 %v141, %v140
    %v148 = vld [vmem:[%s6] sm:$0xff]
    %v149 = vld [vmem:[%s6 + $0x8] sm:$0xff]
    %v150 = vld [vmem:[%s6 + $0x10] sm:$0xff]
    %v151 = vld [vmem:[%s6 + $0x18] sm:$0xff]
    %153 = vset.pattern.permute.xlu0 0
    %154 = vperm.xlu0 %153, %v148
    %v155 = vpop.permute.xlu0 %154
    %158 = vset.pattern.permute.xlu0 0
    %159 = vperm.xlu0 %158, %v149
    %v160 = vpop.permute.xlu0 %159
    %163 = vset.pattern.permute.xlu0 0
    %164 = vperm.xlu0 %163, %v150
    %v165 = vpop.permute.xlu0 %164
    %168 = vset.pattern.permute.xlu0 0
    %169 = vperm.xlu0 %168, %v151
    %v170 = vpop.permute.xlu0 %169
    %v176 = vunpack.c.l.b16 %v142
    %v177 = vunpack.c.l.b16 %v143
    %v178 = vunpack.c.l.b16 %v144
    %v179 = vunpack.c.l.b16 %v145
    %v180 = vpack.c.b16 %v177, %v176
    %v181 = vpack.c.b16 %v179, %v178
    %vm182 = vcmask 261120
    %v184 = vsel %vm182, %v180, 0
    %v187 = vsel %vm182, %v181, 0
    %189 = vmatprep.subr.bf16.mxu0 0
    %190 = vmatpush1.bf16.msra.mxu0 %v146
    %191 = vmatprep.subr.bf16.mxu0 0
    %192 = vmatpush1.bf16.msra.mxu0 %v147
    %193 = vmatprep.subr.bf16.mxu0 0
    %194 = vmatpush1.bf16.msra.mxu0 0
    %195 = vmatprep.subr.bf16.mxu0 0
    %196 = vmatpush1.bf16.msra.mxu0 0
    %197 = vmatprep.subr.bf16.mxu0 0
    %198 = vmatpush1.bf16.msra.mxu0 0
    %199 = vmatprep.subr.bf16.mxu0 0
    %200 = vmatpush1.bf16.msra.mxu0 0
    %201 = vmatprep.subr.bf16.mxu0 0
    %202 = vmatpush1.bf16.msra.mxu0 0
    %203 = vmatprep.subr.bf16.mxu0 0
    %204 = vmatpush1.bf16.msra.mxu0 0
    %205 = vmatprep.subr.bf16.mxu0 0
    %206 = vmatpush1.bf16.msra.mxu0 0
    %207 = vmatprep.subr.bf16.mxu0 0
    %208 = vmatpush1.bf16.msra.mxu0 0
    %209 = vmatprep.subr.bf16.mxu0 0
    %210 = vmatpush1.bf16.msra.mxu0 0
    %211 = vmatprep.subr.bf16.mxu0 0
    %212 = vmatpush1.bf16.msra.mxu0 0
    %213 = vmatprep.subr.bf16.mxu0 0
    %214 = vmatpush1.bf16.msra.mxu0 0
    %215 = vmatprep.subr.bf16.mxu0 0
    %216 = vmatpush1.bf16.msra.mxu0 0
    %217 = vmatprep.subr.bf16.mxu0 0
    %218 = vmatpush1.bf16.msra.mxu0 0
    %219 = vmatprep.subr.bf16.mxu0 0
    %220 = vmatpush1.bf16.msra.mxu0 0
    %221 = vmatprep.mubr.bf16.mxu0 0
    %222 = vmatmul.mubr.bf16.gmra.mrb[0].mxu0 %v184
    %v223 = vpop.f32.mrb[0].mxu0
    %v224 = vadd.f32 %v155, %v223
    %v225 = vpop.f32.mrb[0].mxu0
    %v226 = vpop.f32.mrb[0].mxu0
    %v227 = vadd.f32 %v160, %v226
    %v228 = vpop.f32.mrb[0].mxu0
    %229 = vmatprep.mubr.bf16.mxu0 0
    %230 = vmatmul.mubr.bf16.gmra.mrb[0].mxu0 %v187
    %v231 = vpop.f32.mrb[0].mxu0
    %v232 = vadd.f32 %v165, %v231
    %v233 = vpop.f32.mrb[0].mxu0
    %v234 = vpop.f32.mrb[0].mxu0
    %v235 = vadd.f32 %v170, %v234
    %v236 = vpop.f32.mrb[0].mxu0
    %237 = vdwg.mxu0
    %v238 = vmax.f32 %v224, 0.0
    %v239 = vmax.f32 %v227, 0.0
    %v240 = vmax.f32 %v232, 0.0
    %v241 = vmax.f32 %v235, 0.0
    %v242 = vld [vmem:[%s7] sm:$0xff]
    %v243 = vld [vmem:[%s7 + $0x8] sm:$0xff]
    %v244 = vld [vmem:[%s7 + $0x10] sm:$0xff]
    %v245 = vld [vmem:[%s7 + $0x18] sm:$0xff]
    %247 = vset.pattern.permute.xlu0 0
    %248 = vperm.xlu0 %247, %v242
    %v249 = vpop.permute.xlu0 %248
    %252 = vset.pattern.permute.xlu0 0
    %253 = vperm.xlu0 %252, %v243
    %v254 = vpop.permute.xlu0 %253
    %257 = vset.pattern.permute.xlu0 0
    %258 = vperm.xlu0 %257, %v244
    %v259 = vpop.permute.xlu0 %258
    %262 = vset.pattern.permute.xlu0 0
    %263 = vperm.xlu0 %262, %v245
    %v264 = vpop.permute.xlu0 %263
    %v266 = vmul.f32 %v238, %v249
    %v267 = vmul.f32 %v239, %v254
    %v268 = vmul.f32 %v240, %v259
    %v269 = vmul.f32 %v241, %v264
    %v270 = vadd.f32 %v266, %v267
    %v271 = vadd.f32 %v270, %v268
    %v272 = vadd.f32 %v271, %v269
    %v273 = vrot.slane %v272, 4
    %v274 = vadd.f32 %v272, %v273
    %v275 = vrot.slane %v274, 2
    %v276 = vadd.f32 %v274, %v275
    %v277 = vrot.slane %v276, 1
    %v278 = vadd.f32 %v276, %v277
    %v279 = vld [vmem:[#allocation2] sm:$0x1]
    %281 = vset.pattern.permute.xlu0 0
    %282 = vperm.xlu0 %281, %v279
    %v283 = vpop.permute.xlu0 %282
    %v285 = vlaneseq
    %v286 = vshrl.u32 %v285, 7
    %v287 = vsub.s32 0, %v286
    %v288 = vrot.slane %v283, %v287
    %v289 = vadd.f32 %v278, %v288
    %v290 = vxor.u32 %v289, 2147483648
    %v291 = vmul.f32 %v290, 1.442695
    %v292 = vpow.pop %v291
    %v293 = vadd.f32 %v292, 1.0
    %v294 = vrcp.pop %v293
    %v295 = vmul.f32 1.0, %v294
    %v296 = vld [vmem:[%s1] sm:$0x1]
    %v297 = vlog2.pop %v296
    %v298 = vmul.f32 %v297, 0.6931472
    %v299 = vsub.f32 0.0, %v298
    %v300 = vld [vmem:[%s2] sm:$0x1]
    %v301 = vlog2.pop %v300
    %v302 = vmul.f32 %v301, 0.6931472
    %v303 = vsub.f32 0.0, %v302
    %v304 = vmul.f32 %v295, %v299
    %v305 = vmul.f32 %v304, 1.442695
    %v306 = vpow.pop %v305
    %v307 = vmul.f32 %v295, %v303
    %v308 = vmul.f32 %v307, 1.442695
    %v309 = vpow.pop %v308
    %v310 = vadd.f32 %v306, %v309
    %v311 = vrcp.pop %v310
    %v312 = vmul.f32 1.0, %v311
    %313 = vst [vmem:[#allocation3] sm:$0x1] %v312
    // Predicated region
    $region38: #{tpu_custom_call.1} parent=1 // pred_check
      _
    $region39: #{tpu_custom_call.1} parent=1 // pred_check_branch
      %315 = sbr.rel (0) target = $region41
    $region40: #{tpu_custom_call.1} parent=1 // pred_region
      %s317 = ssub.s32 16, 16
      %318 = vsyncadd [#allocation4], %s317
      %s320 = sshll.u32 [#allocation3], 4
      %s321 = int_to_ptr.vmem [resolvable:$true] %s320
      %323 = dma.vmem_to_hbm [thread:$0]  %s321, 16, %s9, [#allocation4]
    $region41: #{tpu_custom_call.1} parent=1 // pred_fallthru
      _
    // Predicated region
    $region42: #{tpu_custom_call.1} parent=1 // pred_check
      _
    $region43: #{tpu_custom_call.1} parent=1 // pred_check_branch
      %325 = sbr.rel (0) target = $region45
    $region44: #{tpu_custom_call.1} parent=1 // pred_region
      %326 = dma.done [#allocation4], 16
    $region45: #{tpu_custom_call.1} parent=1 // pred_fallthru
      _
    %327 = vsyncpa [#allocation4], 1

</llo_original>
